<compile_context>
chip_gen: v7x
topology: tpu7x:2x2x1
jax: 0.10.0
libtpu: 0.0.40
codegen_flags: <defaults>
</compile_context>

<pallas_src>
import jax
import jax.numpy as jnp
from jax.experimental import pallas as pl
from jax.experimental.pallas import tpu as pltpu

DATA_DIM = 2
HIDDEN_DIM = 64
OUT_DIM = 1
LANE_CHUNK = 256          # vreg-resident sub-chunk width along the batch/lane axis


def _disc_kernel(xT_ref, w1_ref, b1_ref, w2_ref, b2_ref, w3_ref, b3_ref, o_ref):
    # xT: (2, block_b)        w1: (H, 2)   b1: (H, 1)
    # w2: (H, H)              b2: (H, 1)
    # w3: (H, 1) (= W3^T)     b3: (1,)  in SMEM
    # o : (1, block_b)        -- batch on the lane axis (lane-dense stores)
    block_b = o_ref.shape[-1]
    b3 = b3_ref[0]  # SMEM scalar

    # Static chunk loop: offsets are Python ints -> all lane slices are static.
    # Each iteration is independent and ends with its own store, so h1/h2 for a
    # chunk die before the next chunk; small weights are re-read from VMEM per
    # chunk (cheap vld) to keep register pressure low.
    for off in range(0, block_b, LANE_CHUNK):
        xT = xT_ref[:, off:off + LANE_CHUNK]                         # (2, C)
        w1 = w1_ref[...]

        # ---- Layer 1: K=2 contraction as two broadcast FMAs on the VPU ----
        h1 = w1[:, 0:1] * xT[0:1, :] + w1[:, 1:2] * xT[1:2, :] + b1_ref[...]
        h1 = jnp.maximum(h1, 0.0)                                    # (H, C)

        # ---- Layer 2: the only real MXU matmul (64x64 contraction) ----
        h2 = jnp.dot(w2_ref[...], h1, preferred_element_type=jnp.float32) + b2_ref[...]
        h2 = jnp.maximum(h2, 0.0)                                    # (H, C)

        # ---- Layer 3: output dim 1 -> elementwise mul + sublane (XLU) reduce ----
        logit = jnp.sum(w3_ref[...] * h2, axis=0, keepdims=True) + b3   # (1, C)

        o_ref[:, off:off + LANE_CHUNK] = jax.nn.sigmoid(logit).astype(o_ref.dtype)


def _round_up(x, m):
    return (x + m - 1) // m * m


def _default_block_b(batch):
    """Batch tile: large enough to amortize per-step pipeline overhead, >=2 grid
    steps when the batch allows (keeps both v7x TensorCores busy), multiple of
    LANE_CHUNK, capped at 4096 lanes (VMEM stays << 32 MiB on v5e/v6e/v7x)."""
    if batch <= LANE_CHUNK:
        return LANE_CHUNK
    per_core = _round_up(pl.cdiv(batch, 2), LANE_CHUNK)
    return int(min(4096, max(LANE_CHUNK, per_core)))


def discriminator_forward(x, params, *, block_b=None):
    """Forward pass of the Discriminator as one fused Pallas TPU kernel.

    x may be:
      * (B, DATA_DIM)  -- the PyTorch module's layout (one XLA transpose), or
      * (DATA_DIM, B)  -- feature-major (preferred: no HBM staging pass at all).
    Returns (B, 1) float32 sigmoid probabilities, matching the module.
    """
    w1, b1, w2, b2, w3, b3 = params

    if x.ndim != 2:
        raise ValueError(f"expected a 2-D input, got shape {x.shape}")
    if x.shape[1] == DATA_DIM:            # module layout (B, 2); ambiguous (2,2) lands here
        xT = x.T
    elif x.shape[0] == DATA_DIM:          # feature-major fast path (2, B)
        xT = x
    else:
        raise ValueError(f"no axis of size {DATA_DIM} in input shape {x.shape}")
    xT = xT.astype(jnp.float32)
    B = xT.shape[1]

    if block_b is None:
        block_b = _default_block_b(B)
    assert block_b % LANE_CHUNK == 0 and block_b % 128 == 0

    num_blocks = pl.cdiv(B, block_b)
    B_pad = num_blocks * block_b
    if B_pad != B:
        xT = jnp.pad(xT, ((0, 0), (0, B_pad - B)))

    # Small weights/biases: same full block every grid step.
    rep = lambda shape: pl.BlockSpec(shape, lambda i: (0, 0))

    out = pl.pallas_call(
        _disc_kernel,
        out_shape=jax.ShapeDtypeStruct((OUT_DIM, B_pad), jnp.float32),
        grid_spec=pltpu.PrefetchScalarGridSpec(
            num_scalar_prefetch=0,
            grid=(num_blocks,),
            in_specs=[
                pl.BlockSpec((DATA_DIM, block_b), lambda i: (0, i)),   # x^T tile
                rep((HIDDEN_DIM, DATA_DIM)),                           # w1 (H, 2)
                rep((HIDDEN_DIM, 1)),                                  # b1 (H, 1)
                rep((HIDDEN_DIM, HIDDEN_DIM)),                         # w2 (H, H)
                rep((HIDDEN_DIM, 1)),                                  # b2 (H, 1)
                rep((HIDDEN_DIM, 1)),                                  # w3^T (H, 1)
                pl.BlockSpec(memory_space=pltpu.MemorySpace.SMEM),     # b3 scalar
            ],
            out_specs=pl.BlockSpec((OUT_DIM, block_b), lambda i: (0, i)),  # lane-dense
        ),
        compiler_params=pltpu.CompilerParams(
            dimension_semantics=("parallel",),          # megacore-shardable on v7x
            vmem_limit_bytes=32 * 1024 * 1024,          # safe on v5e/v6e/v7x
        ),
    )(xT, w1, b1, w2, b2, w3, b3)

    # Slice to B *before* adding the trailing unit axis so no full padded-buffer
    # relayout copy is materialized.
    return out[0, :B][:, None]


def init_params(key):
    """PyTorch nn.Linear default init (U[-1/sqrt(fan_in), +1/sqrt(fan_in)]).
    Weights in PyTorch (out, in) layout; b1/b2 as (out, 1) columns so they
    broadcast along the lane (batch) axis; w3 stored transposed (H, 1); b3 flat."""
    ks = jax.random.split(key, 6)

    def linear(kw, kb, fan_in, fan_out):
        bound = 1.0 / jnp.sqrt(jnp.asarray(fan_in, jnp.float32))
        w = jax.random.uniform(kw, (fan_out, fan_in), jnp.float32, -bound, bound)
        b = jax.random.uniform(kb, (fan_out,), jnp.float32, -bound, bound)
        return w, b

    w1, b1 = linear(ks[0], ks[1], DATA_DIM, HIDDEN_DIM)     # (64, 2), (64,)
    w2, b2 = linear(ks[2], ks[3], HIDDEN_DIM, HIDDEN_DIM)   # (64, 64), (64,)
    w3, b3 = linear(ks[4], ks[5], HIDDEN_DIM, OUT_DIM)      # (1, 64), (1,)
    return (w1, b1[:, None], w2, b2[:, None], w3.T, b3)


def reference_forward(x, params):
    """Pure-JAX reference matching the PyTorch module (x: (B, DATA_DIM))."""
    w1, b1, w2, b2, w3c, b3 = params
    h1 = jnp.maximum(x @ w1.T + b1.T, 0.0)
    h2 = jnp.maximum(h1 @ w2.T + b2.T, 0.0)
    return jax.nn.sigmoid(h2 @ w3c + b3)


if __name__ == "__main__":
    key = jax.random.PRNGKey(0)
    k_x, k_p = jax.random.split(key)
    params = init_params(k_p)
    fwd = jax.jit(discriminator_forward)

    # Case 1: module-native (B, 2) layout, single grid step (compat path).
    B1 = 16
    x1 = jax.random.normal(jax.random.fold_in(k_x, 0), (B1, DATA_DIM), jnp.float32)
    out1 = jax.block_until_ready(fwd(x1, params))
    ref1 = reference_forward(x1, params)
    assert out1.shape == (B1, OUT_DIM)
    assert jnp.allclose(out1, ref1, atol=1e-5, rtol=1e-5), "mismatch (B, 2) path"

    # Case 2: feature-major (2, B) input (no staging pass), multi-step grid
    # (block_b=512 -> 2 grid steps) with batch padding.
    B2 = 600
    x2T = jax.random.normal(jax.random.fold_in(k_x, 1), (DATA_DIM, B2), jnp.float32)
    out2 = jax.block_until_ready(fwd(x2T, params))
    ref2 = reference_forward(x2T.T, params)
    assert out2.shape == (B2, OUT_DIM)
    assert jnp.allclose(out2, ref2, atol=1e-5, rtol=1e-5), "mismatch (2, B) path"

    print("KERNEL_OK")
</pallas_src>

<mosaic_0001>
module attributes {stable_mosaic.version = 11 : i64} {
  func.func @_disc_kernel(%arg0: i32, %arg1: memref<2x256xf32, #tpu.memory_space<vmem>>, %arg2: memref<64x2xf32, #tpu.memory_space<vmem>>, %arg3: memref<64x1xf32, #tpu.memory_space<vmem>>, %arg4: memref<64x64xf32, #tpu.memory_space<vmem>>, %arg5: memref<64x1xf32, #tpu.memory_space<vmem>>, %arg6: memref<64x1xf32, #tpu.memory_space<vmem>>, %arg7: memref<1xf32, #tpu.memory_space<smem>>, %arg8: memref<1x256xf32, #tpu.memory_space<vmem>>) attributes {dimension_semantics = [#tpu.dimension_semantics<parallel>], iteration_bounds = array<i64: 1>, scalar_prefetch = 0 : i64, scratch_operands = 0 : i64, tpu.core_type = #tpu.core_type<tc>, window_params = [{transform_indices = @transform_0, window_bounds = array<i64: 2, 256>}, {pipeline_mode = #tpu.pipeline_mode<synchronous>, transform_indices = @transform_1, window_bounds = array<i64: 64, 2>}, {pipeline_mode = #tpu.pipeline_mode<synchronous>, transform_indices = @transform_2, window_bounds = array<i64: 64, 1>}, {pipeline_mode = #tpu.pipeline_mode<synchronous>, transform_indices = @transform_3, window_bounds = array<i64: 64, 64>}, {pipeline_mode = #tpu.pipeline_mode<synchronous>, transform_indices = @transform_4, window_bounds = array<i64: 64, 1>}, {pipeline_mode = #tpu.pipeline_mode<synchronous>, transform_indices = @transform_5, window_bounds = array<i64: 64, 1>}, {transform_indices = @transform_6, window_bounds = array<i64: 1>}, {transform_indices = @transform_7, window_bounds = array<i64: 1, 256>}]} {
    %c0 = arith.constant 0 : index
    %0 = memref.load %arg7[%c0] : memref<1xf32, #tpu.memory_space<smem>>
    %c0_0 = arith.constant 0 : index
    %c0_1 = arith.constant 0 : index
    %1 = vector.load %arg1[%c0_0, %c0_1] : memref<2x256xf32, #tpu.memory_space<vmem>>, vector<2x256xf32>
    %c0_2 = arith.constant 0 : index
    %c0_3 = arith.constant 0 : index
    %2 = vector.load %arg2[%c0_2, %c0_3] : memref<64x2xf32, #tpu.memory_space<vmem>>, vector<64x2xf32>
    %3 = vector.extract_strided_slice %2 {offsets = [0, 0], sizes = [64, 1], strides = [1, 1]} : vector<64x2xf32> to vector<64x1xf32>
    %4 = vector.extract_strided_slice %1 {offsets = [0, 0], sizes = [1, 256], strides = [1, 1]} : vector<2x256xf32> to vector<1x256xf32>
    %5 = vector.broadcast %3 : vector<64x1xf32> to vector<64x256xf32>
    %6 = vector.broadcast %4 : vector<1x256xf32> to vector<64x256xf32>
    %7 = arith.mulf %5, %6 : vector<64x256xf32>
    %8 = vector.extract_strided_slice %2 {offsets = [0, 1], sizes = [64, 1], strides = [1, 1]} : vector<64x2xf32> to vector<64x1xf32>
    %9 = vector.extract_strided_slice %1 {offsets = [1, 0], sizes = [1, 256], strides = [1, 1]} : vector<2x256xf32> to vector<1x256xf32>
    %10 = vector.broadcast %8 : vector<64x1xf32> to vector<64x256xf32>
    %11 = vector.broadcast %9 : vector<1x256xf32> to vector<64x256xf32>
    %12 = arith.mulf %10, %11 : vector<64x256xf32>
    %13 = arith.addf %7, %12 : vector<64x256xf32>
    %c0_4 = arith.constant 0 : index
    %c0_5 = arith.constant 0 : index
    %14 = vector.load %arg3[%c0_4, %c0_5] : memref<64x1xf32, #tpu.memory_space<vmem>>, vector<64x1xf32>
    %15 = vector.broadcast %14 : vector<64x1xf32> to vector<64x256xf32>
    %16 = arith.addf %13, %15 : vector<64x256xf32>
    %cst = arith.constant 0.000000e+00 : f32
    %17 = vector.broadcast %cst : f32 to vector<64x256xf32>
    %18 = arith.maximumf %16, %17 : vector<64x256xf32>
    %c0_6 = arith.constant 0 : index
    %c0_7 = arith.constant 0 : index
    %19 = vector.load %arg4[%c0_6, %c0_7] : memref<64x64xf32, #tpu.memory_space<vmem>>, vector<64x64xf32>
    %cst_8 = arith.constant dense<0.000000e+00> : vector<64x256xf32>
    %20 = tpu.matmul %19, %18, %cst_8 {dimension_numbers = #tpu.dot_dimension_numbers<[1], [0], [0], [1], [0, 0, 1, 1], [], []>} : vector<64x64xf32>, vector<64x256xf32>, vector<64x256xf32> -> vector<64x256xf32>
    %c0_9 = arith.constant 0 : index
    %c0_10 = arith.constant 0 : index
    %21 = vector.load %arg5[%c0_9, %c0_10] : memref<64x1xf32, #tpu.memory_space<vmem>>, vector<64x1xf32>
    %22 = vector.broadcast %21 : vector<64x1xf32> to vector<64x256xf32>
    %23 = arith.addf %20, %22 : vector<64x256xf32>
    %cst_11 = arith.constant 0.000000e+00 : f32
    %24 = vector.broadcast %cst_11 : f32 to vector<64x256xf32>
    %25 = arith.maximumf %23, %24 : vector<64x256xf32>
    %c0_12 = arith.constant 0 : index
    %c0_13 = arith.constant 0 : index
    %26 = vector.load %arg6[%c0_12, %c0_13] : memref<64x1xf32, #tpu.memory_space<vmem>>, vector<64x1xf32>
    %27 = vector.broadcast %26 : vector<64x1xf32> to vector<64x256xf32>
    %28 = arith.mulf %27, %25 : vector<64x256xf32>
    %cst_14 = arith.constant dense<0.000000e+00> : vector<256xf32>
    %29 = vector.multi_reduction <add>, %28, %cst_14 [0] : vector<64x256xf32> to vector<256xf32>
    %30 = vector.shape_cast %29 : vector<256xf32> to vector<1x256xf32>
    %31 = vector.broadcast %0 : f32 to vector<1x256xf32>
    %32 = arith.addf %30, %31 : vector<1x256xf32>
    %33 = arith.negf %32 : vector<1x256xf32>
    %34 = math.exp %33 : vector<1x256xf32>
    %cst_15 = arith.constant 1.000000e+00 : f32
    %35 = vector.broadcast %cst_15 : f32 to vector<1x256xf32>
    %36 = arith.addf %35, %34 : vector<1x256xf32>
    %37 = arith.divf %35, %36 : vector<1x256xf32>
    %c0_16 = arith.constant 0 : index
    %c0_17 = arith.constant 0 : index
    %38 = vector.load %arg8[%c0_16, %c0_17] : memref<1x256xf32, #tpu.memory_space<vmem>>, vector<1x256xf32>
    tpu.vector_store %arg8[%c0_16, %c0_17], %37 {strides = array<i32>} : memref<1x256xf32, #tpu.memory_space<vmem>>, vector<1x256xf32>,
    return
  }
  func.func @transform_0(%arg0: i32) -> (i32, i32) {
    %c0_i32 = arith.constant 0 : i32
    %c0_i32_0 = arith.constant 0 : i32
    return %c0_i32, %arg0 : i32, i32
  }
  func.func @transform_1(%arg0: i32) -> (i32, i32) {
    %c0_i32 = arith.constant 0 : i32
    %c0_i32_0 = arith.constant 0 : i32
    %c0_i32_1 = arith.constant 0 : i32
    return %c0_i32, %c0_i32_0 : i32, i32
  }
  func.func @transform_2(%arg0: i32) -> (i32, i32) {
    %c0_i32 = arith.constant 0 : i32
    %c0_i32_0 = arith.constant 0 : i32
    %c0_i32_1 = arith.constant 0 : i32
    return %c0_i32, %c0_i32_0 : i32, i32
  }
  func.func @transform_3(%arg0: i32) -> (i32, i32) {
    %c0_i32 = arith.constant 0 : i32
    %c0_i32_0 = arith.constant 0 : i32
    %c0_i32_1 = arith.constant 0 : i32
    return %c0_i32, %c0_i32_0 : i32, i32
  }
  func.func @transform_4(%arg0: i32) -> (i32, i32) {
    %c0_i32 = arith.constant 0 : i32
    %c0_i32_0 = arith.constant 0 : i32
    %c0_i32_1 = arith.constant 0 : i32
    return %c0_i32, %c0_i32_0 : i32, i32
  }
  func.func @transform_5(%arg0: i32) -> (i32, i32) {
    %c0_i32 = arith.constant 0 : i32
    %c0_i32_0 = arith.constant 0 : i32
    %c0_i32_1 = arith.constant 0 : i32
    return %c0_i32, %c0_i32_0 : i32, i32
  }
  func.func @transform_6(%arg0: i32) -> i32 {
    %c0_i32 = arith.constant 0 : i32
    %c0_i32_0 = arith.constant 0 : i32
    return %c0_i32 : i32
  }
  func.func @transform_7(%arg0: i32) -> (i32, i32) {
    %c0_i32 = arith.constant 0 : i32
    %c0_i32_0 = arith.constant 0 : i32
    return %c0_i32, %arg0 : i32, i32
  }
}

</mosaic_0001>

<llo_original>
// kernel: discriminator_forward.1
$region0: #{discriminator_forward.1}
  #allocation0 [shape = 'u32[]', space=smem, size = 0x4, offset = 0x4, fixed_abs, tag = 'smem constant byte address 0x4 - core index']
  #allocation1 [shape = 'u32[144,128]{1,0:T(1,128)}', space=vmem, size = 0x12000, scoped, tag = 'internal scratch']
  #allocation2 [shape = 'f32[1]{0:T(128)S(6)}', space=smem, size = 0x200, scoped, tag = 'scoped memory for discriminator_forward.1']
  %s0 = inlined_call_operand.vmem [shape: f32[2,256], index: 0, kind: input, shape index: {}]
  %s1 = inlined_call_operand.vmem [shape: f32[64,2], index: 1, kind: input, shape index: {}]
  %s2 = inlined_call_operand.vmem [shape: f32[64,1], index: 2, kind: input, shape index: {}]
  %s3 = inlined_call_operand.vmem [shape: f32[64,64], index: 3, kind: input, shape index: {}]
  %s4 = inlined_call_operand.vmem [shape: f32[64,1], index: 4, kind: input, shape index: {}]
  %s5 = inlined_call_operand.vmem [shape: f32[64,1], index: 5, kind: input, shape index: {}]
  %s6 = inlined_call_operand.<no memory space> [shape: f32[1], index: 6, kind: input, shape index: {}]
  %s7 = inlined_call_operand.vmem [shape: f32[1,256], index: 7, kind: output, shape index: {}]
  %s8 = sld [smem:[#allocation0]]
  $region38: #{discriminator_forward.1} parent=0
    _
  %s10 = ssub.s32 1, %s8
  %s11 = scalar_select 0, %s10, %s8
  %12 = sst [smem:[#allocation2]] %s6
  // Predicated region
  $region2: #{discriminator_forward.1} parent=0 // pred_check
    _
  $region3: #{discriminator_forward.1} parent=0 // pred_check_branch
    %14 = sbr.rel (0) target = $region5
  $region4: #{discriminator_forward.1} parent=0 // pred_region
    _
  $region5: #{discriminator_forward.1} parent=0 // pred_fallthru
    _
  // Predicated region
  $region6: #{discriminator_forward.1} parent=0 // pred_check
    _
  $region7: #{discriminator_forward.1} parent=0 // pred_check_branch
    %16 = sbr.rel (0) target = $region9
  $region8: #{discriminator_forward.1} parent=0 // pred_region
    _
  $region9: #{discriminator_forward.1} parent=0 // pred_fallthru
    _
  // Predicated region
  $region10: #{discriminator_forward.1} parent=0 // pred_check
    _
  $region11: #{discriminator_forward.1} parent=0 // pred_check_branch
    %18 = sbr.rel (0) target = $region13
  $region12: #{discriminator_forward.1} parent=0 // pred_region
    _
  $region13: #{discriminator_forward.1} parent=0 // pred_fallthru
    _
  // Predicated region
  $region14: #{discriminator_forward.1} parent=0 // pred_check
    _
  $region15: #{discriminator_forward.1} parent=0 // pred_check_branch
    %20 = sbr.rel (0) target = $region17
  $region16: #{discriminator_forward.1} parent=0 // pred_region
    _
  $region17: #{discriminator_forward.1} parent=0 // pred_fallthru
    _
  // Predicated region
  $region18: #{discriminator_forward.1} parent=0 // pred_check
    _
  $region19: #{discriminator_forward.1} parent=0 // pred_check_branch
    %22 = sbr.rel (0) target = $region21
  $region20: #{discriminator_forward.1} parent=0 // pred_region
    _
  $region21: #{discriminator_forward.1} parent=0 // pred_fallthru
    _
  // Predicated region
  $region22: #{discriminator_forward.1} parent=0 // pred_check
    _
  $region23: #{discriminator_forward.1} parent=0 // pred_check_branch
    %24 = sbr.rel (0) target = $region25
  $region24: #{discriminator_forward.1} parent=0 // pred_region
    _
  $region25: #{discriminator_forward.1} parent=0 // pred_fallthru
    _
  // Predicated region
  $region26: #{discriminator_forward.1} parent=0 // pred_check
    _
  $region27: #{discriminator_forward.1} parent=0 // pred_check_branch
    %26 = sbr.rel (0) target = $region29
  $region28: #{discriminator_forward.1} parent=0 // pred_region
    _
  $region29: #{discriminator_forward.1} parent=0 // pred_fallthru
    _
  %s27 = sld [smem:[#allocation2]]
  %v28 = vld [vmem:[%s0] sm:$0xf]
  %v29 = vld [vmem:[%s1] sm:$0xff]
  %v30 = vld [vmem:[%s1 + $0x8] sm:$0xff]
  %v31 = vld [vmem:[%s1 + $0x10] sm:$0xff]
  %v32 = vld [vmem:[%s1 + $0x18] sm:$0xff]
  %v33 = vld [vmem:[%s1 + $0x20] sm:$0xff]
  %v34 = vld [vmem:[%s1 + $0x28] sm:$0xff]
  %v35 = vld [vmem:[%s1 + $0x30] sm:$0xff]
  %v36 = vld [vmem:[%s1 + $0x38] sm:$0xff]
  %38 = vset.pattern.permute.xlu0 0
  %39 = vperm.xlu0 %38, %v29
  %v40 = vpop.permute.xlu0 %39
  %43 = vset.pattern.permute.xlu0 0
  %44 = vperm.xlu0 %43, %v30
  %v45 = vpop.permute.xlu0 %44
  %48 = vset.pattern.permute.xlu0 0
  %49 = vperm.xlu0 %48, %v31
  %v50 = vpop.permute.xlu0 %49
  %53 = vset.pattern.permute.xlu0 0
  %54 = vperm.xlu0 %53, %v32
  %v55 = vpop.permute.xlu0 %54
  %58 = vset.pattern.permute.xlu0 0
  %59 = vperm.xlu0 %58, %v33
  %v60 = vpop.permute.xlu0 %59
  %63 = vset.pattern.permute.xlu0 0
  %64 = vperm.xlu0 %63, %v34
  %v65 = vpop.permute.xlu0 %64
  %68 = vset.pattern.permute.xlu0 0
  %69 = vperm.xlu0 %68, %v35
  %v70 = vpop.permute.xlu0 %69
  %73 = vset.pattern.permute.xlu0 0
  %74 = vperm.xlu0 %73, %v36
  %v75 = vpop.permute.xlu0 %74
  %v78 = vlaneseq
  %v79 = vshrl.u32 %v78, 7
  %v80 = vsub.s32 0, %v79
  %v81 = vrot.slane %v28, %v80
  %v82 = vlaneseq
  %v83 = vshrl.u32 %v82, 7
  %v84 = vsub.s32 2, %v83
  %v85 = vrot.slane %v28, %v84
  %v88 = vlaneseq
  %v89 = vshrl.u32 %v88, 7
  %v90 = vsub.s32 0, %v89
  %v91 = vrot.slane %v81, %v90
  %v92 = vlaneseq
  %v93 = vshrl.u32 %v92, 7
  %v94 = vsub.s32 0, %v93
  %v95 = vrot.slane %v85, %v94
  %v96 = vmul.f32 %v40, %v91
  %v97 = vmul.f32 %v40, %v95
  %v98 = vmul.f32 %v45, %v91
  %v99 = vmul.f32 %v45, %v95
  %v100 = vmul.f32 %v50, %v91
  %v101 = vmul.f32 %v50, %v95
  %v102 = vmul.f32 %v55, %v91
  %v103 = vmul.f32 %v55, %v95
  %v104 = vmul.f32 %v60, %v91
  %v105 = vmul.f32 %v60, %v95
  %v106 = vmul.f32 %v65, %v91
  %v107 = vmul.f32 %v65, %v95
  %v108 = vmul.f32 %v70, %v91
  %v109 = vmul.f32 %v70, %v95
  %v110 = vmul.f32 %v75, %v91
  %v111 = vmul.f32 %v75, %v95
  %112 = vset.pattern.permute.xlu0 1
  %113 = vperm.xlu0 %112, %v29
  %v114 = vpop.permute.xlu0 %113
  %116 = vset.pattern.permute.xlu0 1
  %117 = vperm.xlu0 %116, %v30
  %v118 = vpop.permute.xlu0 %117
  %120 = vset.pattern.permute.xlu0 1
  %121 = vperm.xlu0 %120, %v31
  %v122 = vpop.permute.xlu0 %121
  %124 = vset.pattern.permute.xlu0 1
  %125 = vperm.xlu0 %124, %v32
  %v126 = vpop.permute.xlu0 %125
  %128 = vset.pattern.permute.xlu0 1
  %129 = vperm.xlu0 %128, %v33
  %v130 = vpop.permute.xlu0 %129
  %132 = vset.pattern.permute.xlu0 1
  %133 = vperm.xlu0 %132, %v34
  %v134 = vpop.permute.xlu0 %133
  %136 = vset.pattern.permute.xlu0 1
  %137 = vperm.xlu0 %136, %v35
  %v138 = vpop.permute.xlu0 %137
  %140 = vset.pattern.permute.xlu0 1
  %141 = vperm.xlu0 %140, %v36
  %v142 = vpop.permute.xlu0 %141
  %v144 = vlaneseq
  %v145 = vshrl.u32 %v144, 7
  %v146 = vsub.s32 1, %v145
  %v147 = vrot.slane %v28, %v146
  %v148 = vlaneseq
  %v149 = vshrl.u32 %v148, 7
  %v150 = vsub.s32 3, %v149
  %v151 = vrot.slane %v28, %v150
  %v154 = vlaneseq
  %v155 = vshrl.u32 %v154, 7
  %v156 = vsub.s32 1, %v155
  %v157 = vrot.slane %v147, %v156
  %v158 = vlaneseq
  %v159 = vshrl.u32 %v158, 7
  %v160 = vsub.s32 1, %v159
  %v161 = vrot.slane %v151, %v160
  %v162 = vmul.f32 %v114, %v157
  %v163 = vmul.f32 %v114, %v161
  %v164 = vmul.f32 %v118, %v157
  %v165 = vmul.f32 %v118, %v161
  %v166 = vmul.f32 %v122, %v157
  %v167 = vmul.f32 %v122, %v161
  %v168 = vmul.f32 %v126, %v157
  %v169 = vmul.f32 %v126, %v161
  %v170 = vmul.f32 %v130, %v157
  %v171 = vmul.f32 %v130, %v161
  %v172 = vmul.f32 %v134, %v157
  %v173 = vmul.f32 %v134, %v161
  %v174 = vmul.f32 %v138, %v157
  %v175 = vmul.f32 %v138, %v161
  %v176 = vmul.f32 %v142, %v157
  %v177 = vmul.f32 %v142, %v161
  %v178 = vadd.f32 %v96, %v162
  %v179 = vadd.f32 %v97, %v163
  %v180 = vadd.f32 %v98, %v164
  %v181 = vadd.f32 %v99, %v165
  %v182 = vadd.f32 %v100, %v166
  %v183 = vadd.f32 %v101, %v167
  %v184 = vadd.f32 %v102, %v168
  %v185 = vadd.f32 %v103, %v169
  %v186 = vadd.f32 %v104, %v170
  %v187 = vadd.f32 %v105, %v171
  %v188 = vadd.f32 %v106, %v172
  %v189 = vadd.f32 %v107, %v173
  %v190 = vadd.f32 %v108, %v174
  %v191 = vadd.f32 %v109, %v175
  %v192 = vadd.f32 %v110, %v176
  %v193 = vadd.f32 %v111, %v177
  %v194 = vld [vmem:[%s2] sm:$0xff]
  %v195 = vld [vmem:[%s2 + $0x8] sm:$0xff]
  %v196 = vld [vmem:[%s2 + $0x10] sm:$0xff]
  %v197 = vld [vmem:[%s2 + $0x18] sm:$0xff]
  %v198 = vld [vmem:[%s2 + $0x20] sm:$0xff]
  %v199 = vld [vmem:[%s2 + $0x28] sm:$0xff]
  %v200 = vld [vmem:[%s2 + $0x30] sm:$0xff]
  %v201 = vld [vmem:[%s2 + $0x38] sm:$0xff]
  %203 = vset.pattern.permute.xlu0 0
  %204 = vperm.xlu0 %203, %v194
  %v205 = vpop.permute.xlu0 %204
  %208 = vset.pattern.permute.xlu0 0
  %209 = vperm.xlu0 %208, %v195
  %v210 = vpop.permute.xlu0 %209
  %213 = vset.pattern.permute.xlu0 0
  %214 = vperm.xlu0 %213, %v196
  %v215 = vpop.permute.xlu0 %214
  %218 = vset.pattern.permute.xlu0 0
  %219 = vperm.xlu0 %218, %v197
  %v220 = vpop.permute.xlu0 %219
  %223 = vset.pattern.permute.xlu0 0
  %224 = vperm.xlu0 %223, %v198
  %v225 = vpop.permute.xlu0 %224
  %228 = vset.pattern.permute.xlu0 0
  %229 = vperm.xlu0 %228, %v199
  %v230 = vpop.permute.xlu0 %229
  %233 = vset.pattern.permute.xlu0 0
  %234 = vperm.xlu0 %233, %v200
  %v235 = vpop.permute.xlu0 %234
  %238 = vset.pattern.permute.xlu0 0
  %239 = vperm.xlu0 %238, %v201
  %v240 = vpop.permute.xlu0 %239
  %v242 = vadd.f32 %v178, %v205
  %v243 = vadd.f32 %v179, %v205
  %v244 = vadd.f32 %v180, %v210
  %v245 = vadd.f32 %v181, %v210
  %v246 = vadd.f32 %v182, %v215
  %v247 = vadd.f32 %v183, %v215
  %v248 = vadd.f32 %v184, %v220
  %v249 = vadd.f32 %v185, %v220
  %v250 = vadd.f32 %v186, %v225
  %v251 = vadd.f32 %v187, %v225
  %v252 = vadd.f32 %v188, %v230
  %v253 = vadd.f32 %v189, %v230
  %v254 = vadd.f32 %v190, %v235
  %v255 = vadd.f32 %v191, %v235
  %v256 = vadd.f32 %v192, %v240
  %v257 = vadd.f32 %v193, %v240
  %v258 = vmax.f32 %v242, 0.0
  %v259 = vmax.f32 %v243, 0.0
  %v260 = vmax.f32 %v244, 0.0
  %v261 = vmax.f32 %v245, 0.0
  %v262 = vmax.f32 %v246, 0.0
  %v263 = vmax.f32 %v247, 0.0
  %v264 = vmax.f32 %v248, 0.0
  %v265 = vmax.f32 %v249, 0.0
  %v266 = vmax.f32 %v250, 0.0
  %v267 = vmax.f32 %v251, 0.0
  %v268 = vmax.f32 %v252, 0.0
  %v269 = vmax.f32 %v253, 0.0
  %v270 = vmax.f32 %v254, 0.0
  %v271 = vmax.f32 %v255, 0.0
  %v272 = vmax.f32 %v256, 0.0
  %v273 = vmax.f32 %v257, 0.0
  %v274 = vld [vmem:[%s3] sm:$0xff]
  %v275 = vld [vmem:[%s3 + $0x8] sm:$0xff]
  %v276 = vld [vmem:[%s3 + $0x10] sm:$0xff]
  %v277 = vld [vmem:[%s3 + $0x18] sm:$0xff]
  %v278 = vld [vmem:[%s3 + $0x20] sm:$0xff]
  %v279 = vld [vmem:[%s3 + $0x28] sm:$0xff]
  %v280 = vld [vmem:[%s3 + $0x30] sm:$0xff]
  %v281 = vld [vmem:[%s3 + $0x38] sm:$0xff]
  %v282 = vld [vmem:[%s4] sm:$0xff]
  %v283 = vld [vmem:[%s4 + $0x8] sm:$0xff]
  %v284 = vld [vmem:[%s4 + $0x10] sm:$0xff]
  %v285 = vld [vmem:[%s4 + $0x18] sm:$0xff]
  %v286 = vld [vmem:[%s4 + $0x20] sm:$0xff]
  %v287 = vld [vmem:[%s4 + $0x28] sm:$0xff]
  %v288 = vld [vmem:[%s4 + $0x30] sm:$0xff]
  %v289 = vld [vmem:[%s4 + $0x38] sm:$0xff]
  %291 = vset.pattern.permute.xlu0 0
  %292 = vperm.xlu0 %291, %v282
  %v293 = vpop.permute.xlu0 %292
  %296 = vset.pattern.permute.xlu0 0
  %297 = vperm.xlu0 %296, %v283
  %v298 = vpop.permute.xlu0 %297
  %301 = vset.pattern.permute.xlu0 0
  %302 = vperm.xlu0 %301, %v284
  %v303 = vpop.permute.xlu0 %302
  %306 = vset.pattern.permute.xlu0 0
  %307 = vperm.xlu0 %306, %v285
  %v308 = vpop.permute.xlu0 %307
  %311 = vset.pattern.permute.xlu0 0
  %312 = vperm.xlu0 %311, %v286
  %v313 = vpop.permute.xlu0 %312
  %316 = vset.pattern.permute.xlu0 0
  %317 = vperm.xlu0 %316, %v287
  %v318 = vpop.permute.xlu0 %317
  %321 = vset.pattern.permute.xlu0 0
  %322 = vperm.xlu0 %321, %v288
  %v323 = vpop.permute.xlu0 %322
  %326 = vset.pattern.permute.xlu0 0
  %327 = vperm.xlu0 %326, %v289
  %v328 = vpop.permute.xlu0 %327
  %vm330 = vcmask 523264
  %v332 = vsel %vm330, %v274, 0
  %v335 = vsel %vm330, %v275, 0
  %v338 = vsel %vm330, %v276, 0
  %v341 = vsel %vm330, %v277, 0
  %v344 = vsel %vm330, %v278, 0
  %v347 = vsel %vm330, %v279, 0
  %v350 = vsel %vm330, %v280, 0
  %v353 = vsel %vm330, %v281, 0
  %355 = vmatprep.subr.mxu0 %v259
  %356 = vmatpush1.msra.mxu0 %v258
  %357 = vmatprep.subr.mxu0 %v261
  %358 = vmatpush1.msra.mxu0 %v260
  %359 = vmatprep.subr.mxu0 %v263
  %360 = vmatpush1.msra.mxu0 %v262
  %361 = vmatprep.subr.mxu0 %v265
  %362 = vmatpush1.msra.mxu0 %v264
  %363 = vmatprep.subr.mxu0 %v267
  %364 = vmatpush1.msra.mxu0 %v266
  %365 = vmatprep.subr.mxu0 %v269
  %366 = vmatpush1.msra.mxu0 %v268
  %367 = vmatprep.subr.mxu0 %v271
  %368 = vmatpush1.msra.mxu0 %v270
  %369 = vmatprep.subr.mxu0 %v273
  %370 = vmatpush1.msra.mxu0 %v272
  %371 = vmatprep.subr.mxu0 0.0
  %372 = vmatpush1.msra.mxu0 0.0
  %373 = vmatprep.subr.mxu0 0.0
  %374 = vmatpush1.msra.mxu0 0.0
  %375 = vmatprep.subr.mxu0 0.0
  %376 = vmatpush1.msra.mxu0 0.0
  %377 = vmatprep.subr.mxu0 0.0
  %378 = vmatpush1.msra.mxu0 0.0
  %379 = vmatprep.subr.mxu0 0.0
  %380 = vmatpush1.msra.mxu0 0.0
  %381 = vmatprep.subr.mxu0 0.0
  %382 = vmatpush1.msra.mxu0 0.0
  %383 = vmatprep.subr.mxu0 0.0
  %384 = vmatpush1.msra.mxu0 0.0
  %385 = vmatprep.subr.mxu0 0.0
  %386 = vmatpush1.msra.mxu0 0.0
  %387 = vmatprep.subr.mxu0 0.0
  %388 = vmatpush1.msra.mxu0 0.0
  %389 = vmatprep.subr.mxu0 0.0
  %390 = vmatpush1.msra.mxu0 0.0
  %391 = vmatprep.subr.mxu0 0.0
  %392 = vmatpush1.msra.mxu0 0.0
  %393 = vmatprep.subr.mxu0 0.0
  %394 = vmatpush1.msra.mxu0 0.0
  %395 = vmatprep.subr.mxu0 0.0
  %396 = vmatpush1.msra.mxu0 0.0
  %397 = vmatprep.subr.mxu0 0.0
  %398 = vmatpush1.msra.mxu0 0.0
  %399 = vmatprep.subr.mxu0 0.0
  %400 = vmatpush1.msra.mxu0 0.0
  %401 = vmatprep.subr.mxu0 0.0
  %402 = vmatpush1.msra.mxu0 0.0
  %403 = vmatprep.subr.mxu0 0.0
  %404 = vmatpush1.msra.mxu0 0.0
  %405 = vmatprep.subr.mxu0 0.0
  %406 = vmatpush1.msra.mxu0 0.0
  %407 = vmatprep.subr.mxu0 0.0
  %408 = vmatpush1.msra.mxu0 0.0
  %409 = vmatprep.subr.mxu0 0.0
  %410 = vmatpush1.msra.mxu0 0.0
  %411 = vmatprep.subr.mxu0 0.0
  %412 = vmatpush1.msra.mxu0 0.0
  %413 = vmatprep.subr.mxu0 0.0
  %414 = vmatpush1.msra.mxu0 0.0
  %415 = vmatprep.subr.mxu0 0.0
  %416 = vmatpush1.msra.mxu0 0.0
  %417 = vmatprep.subr.mxu0 0.0
  %418 = vmatpush1.msra.mxu0 0.0
  %419 = vmatprep.mubr.f32.mxu0 0.0
  %420 = vmatmul.mubr.f32.gmra.mrb[0].mxu0 %v332
  %v421 = vpop.f32.mrb[0].mxu0
  %v422 = vadd.f32 %v293, %v421
  %v423 = vpop.f32.mrb[0].mxu0
  %v424 = vadd.f32 %v293, %v423
  %425 = vmatprep.mubr.f32.mxu0 0.0
  %426 = vmatmul.mubr.f32.gmra.mrb[0].mxu0 %v335
  %v427 = vpop.f32.mrb[0].mxu0
  %v428 = vadd.f32 %v298, %v427
  %v429 = vpop.f32.mrb[0].mxu0
  %v430 = vadd.f32 %v298, %v429
  %431 = vmatprep.mubr.f32.mxu0 0.0
  %432 = vmatmul.mubr.f32.gmra.mrb[0].mxu0 %v338
  %v433 = vpop.f32.mrb[0].mxu0
  %v434 = vadd.f32 %v303, %v433
  %v435 = vpop.f32.mrb[0].mxu0
  %v436 = vadd.f32 %v303, %v435
  %437 = vmatprep.mubr.f32.mxu0 0.0
  %438 = vmatmul.mubr.f32.gmra.mrb[0].mxu0 %v341
  %v439 = vpop.f32.mrb[0].mxu0
  %v440 = vadd.f32 %v308, %v439
  %v441 = vpop.f32.mrb[0].mxu0
  %v442 = vadd.f32 %v308, %v441
  %443 = vmatprep.mubr.f32.mxu0 0.0
  %444 = vmatmul.mubr.f32.gmra.mrb[0].mxu0 %v344
  %v445 = vpop.f32.mrb[0].mxu0
  %v446 = vadd.f32 %v313, %v445
  %v447 = vpop.f32.mrb[0].mxu0
  %v448 = vadd.f32 %v313, %v447
  %449 = vmatprep.mubr.f32.mxu0 0.0
  %450 = vmatmul.mubr.f32.gmra.mrb[0].mxu0 %v347
  %v451 = vpop.f32.mrb[0].mxu0
  %v452 = vadd.f32 %v318, %v451
  %v453 = vpop.f32.mrb[0].mxu0
  %v454 = vadd.f32 %v318, %v453
  %455 = vmatprep.mubr.f32.mxu0 0.0
  %456 = vmatmul.mubr.f32.gmra.mrb[0].mxu0 %v350
  %v457 = vpop.f32.mrb[0].mxu0
  %v458 = vadd.f32 %v323, %v457
  %v459 = vpop.f32.mrb[0].mxu0
  %v460 = vadd.f32 %v323, %v459
  %461 = vmatprep.mubr.f32.mxu0 0.0
  %462 = vmatmul.mubr.f32.gmra.mrb[0].mxu0 %v353
  %v463 = vpop.f32.mrb[0].mxu0
  %v464 = vadd.f32 %v328, %v463
  %v465 = vpop.f32.mrb[0].mxu0
  %v466 = vadd.f32 %v328, %v465
  %467 = vdwg.mxu0
  %v468 = vmax.f32 %v422, 0.0
  %v469 = vmax.f32 %v424, 0.0
  %v470 = vmax.f32 %v428, 0.0
  %v471 = vmax.f32 %v430, 0.0
  %v472 = vmax.f32 %v434, 0.0
  %v473 = vmax.f32 %v436, 0.0
  %v474 = vmax.f32 %v440, 0.0
  %v475 = vmax.f32 %v442, 0.0
  %v476 = vmax.f32 %v446, 0.0
  %v477 = vmax.f32 %v448, 0.0
  %v478 = vmax.f32 %v452, 0.0
  %v479 = vmax.f32 %v454, 0.0
  %v480 = vmax.f32 %v458, 0.0
  %v481 = vmax.f32 %v460, 0.0
  %v482 = vmax.f32 %v464, 0.0
  %v483 = vmax.f32 %v466, 0.0
  %v484 = vld [vmem:[%s5] sm:$0xff]
  %v485 = vld [vmem:[%s5 + $0x8] sm:$0xff]
  %v486 = vld [vmem:[%s5 + $0x10] sm:$0xff]
  %v487 = vld [vmem:[%s5 + $0x18] sm:$0xff]
  %v488 = vld [vmem:[%s5 + $0x20] sm:$0xff]
  %v489 = vld [vmem:[%s5 + $0x28] sm:$0xff]
  %v490 = vld [vmem:[%s5 + $0x30] sm:$0xff]
  %v491 = vld [vmem:[%s5 + $0x38] sm:$0xff]
  %493 = vset.pattern.permute.xlu0 0
  %494 = vperm.xlu0 %493, %v484
  %v495 = vpop.permute.xlu0 %494
  %498 = vset.pattern.permute.xlu0 0
  %499 = vperm.xlu0 %498, %v485
  %v500 = vpop.permute.xlu0 %499
  %503 = vset.pattern.permute.xlu0 0
  %504 = vperm.xlu0 %503, %v486
  %v505 = vpop.permute.xlu0 %504
  %508 = vset.pattern.permute.xlu0 0
  %509 = vperm.xlu0 %508, %v487
  %v510 = vpop.permute.xlu0 %509
  %513 = vset.pattern.permute.xlu0 0
  %514 = vperm.xlu0 %513, %v488
  %v515 = vpop.permute.xlu0 %514
  %518 = vset.pattern.permute.xlu0 0
  %519 = vperm.xlu0 %518, %v489
  %v520 = vpop.permute.xlu0 %519
  %523 = vset.pattern.permute.xlu0 0
  %524 = vperm.xlu0 %523, %v490
  %v525 = vpop.permute.xlu0 %524
  %528 = vset.pattern.permute.xlu0 0
  %529 = vperm.xlu0 %528, %v491
  %v530 = vpop.permute.xlu0 %529
  %v532 = vmul.f32 %v495, %v468
  %v533 = vmul.f32 %v495, %v469
  %v534 = vmul.f32 %v500, %v470
  %v535 = vmul.f32 %v500, %v471
  %v536 = vmul.f32 %v505, %v472
  %v537 = vmul.f32 %v505, %v473
  %v538 = vmul.f32 %v510, %v474
  %v539 = vmul.f32 %v510, %v475
  %v540 = vmul.f32 %v515, %v476
  %v541 = vmul.f32 %v515, %v477
  %v542 = vmul.f32 %v520, %v478
  %v543 = vmul.f32 %v520, %v479
  %v544 = vmul.f32 %v525, %v480
  %v545 = vmul.f32 %v525, %v481
  %v546 = vmul.f32 %v530, %v482
  %v547 = vmul.f32 %v530, %v483
  %v548 = vadd.f32 %v532, %v534
  %v549 = vadd.f32 %v548, %v536
  %v550 = vadd.f32 %v549, %v538
  %v551 = vadd.f32 %v550, %v540
  %v552 = vadd.f32 %v551, %v542
  %v553 = vadd.f32 %v552, %v544
  %v554 = vadd.f32 %v553, %v546
  %v555 = vrot.slane %v554, 4
  %v556 = vadd.f32 %v554, %v555
  %v557 = vrot.slane %v556, 2
  %v558 = vadd.f32 %v556, %v557
  %v559 = vrot.slane %v558, 1
  %v560 = vadd.f32 %v558, %v559
  %v561 = vadd.f32 %v533, %v535
  %v562 = vadd.f32 %v561, %v537
  %v563 = vadd.f32 %v562, %v539
  %v564 = vadd.f32 %v563, %v541
  %v565 = vadd.f32 %v564, %v543
  %v566 = vadd.f32 %v565, %v545
  %v567 = vadd.f32 %v566, %v547
  %v568 = vrot.slane %v567, 4
  %v569 = vadd.f32 %v567, %v568
  %v570 = vrot.slane %v569, 2
  %v571 = vadd.f32 %v569, %v570
  %v572 = vrot.slane %v571, 1
  %v573 = vadd.f32 %v571, %v572
  %v574 = vstv %s27
  %v575 = vadd.f32 %v560, %v574
  %v576 = vadd.f32 %v573, %v574
  %v577 = vxor.u32 %v575, 2147483648
  %v578 = vxor.u32 %v576, 2147483648
  %v579 = vmul.f32 %v577, 1.442695
  %v580 = vpow.pop %v579
  %v581 = vmul.f32 %v578, 1.442695
  %v582 = vpow.pop %v581
  %v583 = vadd.f32 %v580, 1.0
  %v584 = vadd.f32 %v582, 1.0
  %v585 = vrcp.pop %v583
  %v586 = vmul.f32 1.0, %v585
  %v587 = vrcp.pop %v584
  %v588 = vmul.f32 1.0, %v587
  %v591 = vcombine.low %v586, %v588
  %v593 = vunpack.c.l.s4 1966171168
  %v594 = vunpack.c.0.s8 %v593
  %v595 = vlaneseq
  %v596 = vshrl.u32 %v595, 7
  %v597 = vsub.s32 %v594, %v596
  %v598 = vrot.slane %v591, %v597
  %v600 = vunpack.c.l.s4 1966171168
  %v601 = vunpack.c.0.s8 %v600
  %v602 = vlaneseq
  %v603 = vshrl.u32 %v602, 7
  %v604 = vsub.s32 %v601, %v603
  %v605 = vrot.slane %v598, %v604
  %v607 = vlaneseq
  %vm608 = vcmp.ge.s32.totalorder %v607, 0
  %vm609 = vcmp.lt.s32.totalorder %v607, 256
  %vm610 = vmand %vm608, %vm609
  %611 = vst.msk [vmem:[%s7] sm:$0x3] %vm610, %v605
  // Predicated region
  $region30: #{discriminator_forward.1} parent=0 // pred_check
    _
  $region31: #{discriminator_forward.1} parent=0 // pred_check_branch
    %613 = sbr.rel (0) target = $region33
  $region32: #{discriminator_forward.1} parent=0 // pred_region
    _
  $region33: #{discriminator_forward.1} parent=0 // pred_fallthru
    _
  // Predicated region
  $region34: #{discriminator_forward.1} parent=0 // pred_check
    _
  $region35: #{discriminator_forward.1} parent=0 // pred_check_branch
    %615 = sbr.rel (0) target = $region37
  $region36: #{discriminator_forward.1} parent=0 // pred_region
    _
  $region37: #{discriminator_forward.1} parent=0 // pred_fallthru
    _

</llo_original>
